<compile_context>
chip_gen: v7x
topology: tpu7x:2x2x1
jax: 0.10.0
libtpu: 0.0.40
codegen_flags: <defaults>
</compile_context>

<pallas_src>
import functools

import jax
import jax.numpy as jnp
from jax.experimental import pallas as pl
from jax.experimental.pallas import tpu as pltpu


def _round_up(x, m):
    return ((x + m - 1) // m) * m


def _smoothing_ce_kernel(x_ref, t_ref, o_ref, *, smoothing, total_n, row_tile):
    i = pl.program_id(0)

    x = x_ref[...].astype(jnp.float32)        # (rows, C) logits, cast on the VPU
    t = t_ref[...]                            # (rows, 1) int32 class indices
    rows, C = x.shape

    # Validity mask for the trailing partial tile, applied to x right after the
    # load so garbage rows never produce Inf/NaN intermediates.
    row_global = i * row_tile + jax.lax.broadcasted_iota(jnp.int32, (rows, 1), 0)
    valid = row_global < total_n              # (rows, 1) bool
    x = jnp.where(valid, x, 0.0)

    # Numerically stable log-sum-exp pieces (class axis == lane axis).
    m = jnp.max(x, axis=1, keepdims=True)                         # XLU reduce 1
    z = x - m
    se = jnp.sum(jnp.exp(z), axis=1, keepdims=True)               # XLU reduce 2

    # Smoothed weights sum to 1, so the per-row loss folds to a single weighted
    # lane-sum against z:  loss_row = log(se) - sum_c w_c * z_c.
    off = smoothing / (C - 1)                 # uniform off-target weight
    on = 1.0 - smoothing                      # weight at the target class
    col = jax.lax.broadcasted_iota(jnp.int32, z.shape, 1)
    w = jnp.where(col == t, on, off)
    wz = jnp.sum(w * z, axis=1, keepdims=True)                    # XLU reduce 3

    per_row = jnp.log(se) - wz                                    # (rows, 1)
    per_row = jnp.where(valid, per_row, 0.0)

    # Per-tile partial sum, stored as an unmasked lane-dense (1, 1, 128) row
    # (value in lane 0, zeros elsewhere); wrapper sums all partials.
    tile_sum = jnp.sum(per_row)
    lane = jax.lax.broadcasted_iota(jnp.int32, (1, 1, 128), 2)
    o_ref[...] = jnp.where(lane == 0, tile_sum, 0.0)


def _pick_row_tile(N, C, itemsize, vmem_physical):
    # Scoped VMEM target (same value the wrapper sets as vmem_limit_bytes):
    # v5e/v6e -> 96 MiB, v7x -> 48 MiB.
    vmem_limit = min(vmem_physical * 3 // 4, 96 * 1024 * 1024)
    usable = (vmem_limit * 3) // 5            # headroom for outputs/bookkeeping

    # Native sublane tile for the logits dtype: 8 (f32), 16 (bf16), 32 (int8/fp8).
    gran = max(8, 32 // max(itemsize, 1))

    # Full per-row VMEM cost:
    #   2x native-dtype logits blocks (double buffered)
    # + ~3x f32 full-tile temporaries in the kernel body (z, exp(z), w*z)
    # + 2x lane-padded (row, 1) int32 targets blocks (128 lanes each).
    per_row = 2 * C * itemsize + 3 * C * 4 + 2 * 128 * 4
    rows = max(usable // per_row, gran)
    if rows >= 128:
        rows = (rows // 128) * 128
    else:
        rows = (rows // gran) * gran
    rows = min(rows, 16384)                   # bound per-tile f32 accumulation

    # Keep >= 2 grid tiles whenever possible so the "parallel" axis can shard
    # across both TensorCores on v7x (harmless on 1-TC chips).
    two_tile_cap = _round_up((N + 1) // 2, gran)
    rows = min(rows, max(two_tile_cap, gran), _round_up(N, gran))
    return max(rows, gran)


def smoothing_cross_entropy_loss(inputs, targets, smoothing=0.0, row_tile=None):
    """inputs: (N, C) float (any dtype), targets: (N,) int -> scalar f32 mean loss."""
    N, C = inputs.shape
    assert C >= 2, "smoothing/(C-1) requires at least 2 classes"
    assert 0.0 <= smoothing < 1.0, "smoothing must be in [0, 1)"

    try:
        vmem_physical = int(pltpu.get_tpu_info().vmem_capacity_bytes)
    except Exception:
        vmem_physical = 64 * 1024 * 1024      # conservative fallback (v7x per-core)

    itemsize = jnp.dtype(inputs.dtype).itemsize
    if row_tile is None:
        row_tile = _pick_row_tile(N, C, itemsize, vmem_physical)

    num_tiles = pl.cdiv(N, row_tile)
    targets2d = targets.astype(jnp.int32).reshape(N, 1)

    kernel = functools.partial(
        _smoothing_ce_kernel,
        smoothing=float(smoothing),
        total_n=N,
        row_tile=row_tile,
    )

    # Generation-aware scoped-VMEM cap (raised above the small defaults, with
    # headroom below physical capacity: 96 MiB on v5e/v6e, 48 MiB on v7x).
    vmem_limit = int(min(vmem_physical * 3 // 4, 96 * 1024 * 1024))

    partials = pl.pallas_call(
        kernel,
        out_shape=jax.ShapeDtypeStruct((num_tiles, 1, 128), jnp.float32),
        grid_spec=pltpu.PrefetchScalarGridSpec(
            num_scalar_prefetch=0,
            grid=(num_tiles,),
            in_specs=[
                pl.BlockSpec((row_tile, C), lambda i: (i, 0)),   # native dtype logits
                pl.BlockSpec((row_tile, 1), lambda i: (i, 0)),   # int32 targets
            ],
            out_specs=pl.BlockSpec((1, 1, 128), lambda i: (i, 0, 0)),
        ),
        compiler_params=pltpu.CompilerParams(
            dimension_semantics=("parallel",),   # independent tiles -> both TCs on v7x
            vmem_limit_bytes=vmem_limit,
        ),
    )(inputs, targets2d)

    return jnp.sum(partials) / jnp.float32(N)


def _reference(inputs, targets, smoothing):
    # Pure-JAX reference mirroring the PyTorch forward.
    log_prob = jax.nn.log_softmax(inputs.astype(jnp.float32), axis=1)
    C = inputs.shape[1]
    onehot = jax.nn.one_hot(targets, C, dtype=jnp.float32)
    t = (1.0 - smoothing) * onehot + smoothing / (C - 1) * (1.0 - onehot)
    return jnp.mean(-jnp.sum(t * log_prob, axis=1))


if __name__ == "__main__":
    key = jax.random.PRNGKey(0)
    k1, k2 = jax.random.split(key)

    # Primary test: batch=8, classes=32, f32 logits.
    N, C = 8, 32
    smoothing = 0.1
    inputs = jax.random.normal(k1, (N, C), dtype=jnp.float32)
    targets = jax.random.randint(k2, (N,), 0, C, dtype=jnp.int32)

    loss = smoothing_cross_entropy_loss(inputs, targets, smoothing=smoothing)
    loss = jax.block_until_ready(loss)
    ref = _reference(inputs, targets, smoothing)
    assert jnp.allclose(loss, ref, atol=1e-5, rtol=1e-5), (loss, ref)

    # Secondary test: bf16 streaming, multiple tiles, trailing partial tile
    # (N=40 with row_tile=16 -> 3 tiles, last one half-masked).
    N2, C2 = 40, 128
    x2 = jax.random.normal(k1, (N2, C2), dtype=jnp.bfloat16)
    t2 = jax.random.randint(k2, (N2,), 0, C2, dtype=jnp.int32)
    loss2 = smoothing_cross_entropy_loss(x2, t2, smoothing=0.2, row_tile=16)
    loss2 = jax.block_until_ready(loss2)
    ref2 = _reference(x2, t2, 0.2)
    assert jnp.allclose(loss2, ref2, atol=1e-4, rtol=1e-4), (loss2, ref2)

    # Tertiary test: auto row_tile picker (bf16, should choose >=2 tiles).
    N3, C3 = 48, 64
    x3 = jax.random.normal(k2, (N3, C3), dtype=jnp.bfloat16)
    t3 = jax.random.randint(k1, (N3,), 0, C3, dtype=jnp.int32)
    loss3 = smoothing_cross_entropy_loss(x3, t3, smoothing=0.05)
    loss3 = jax.block_until_ready(loss3)
    ref3 = _reference(x3, t3, 0.05)
    assert jnp.allclose(loss3, ref3, atol=1e-4, rtol=1e-4), (loss3, ref3)

    print("KERNEL_OK")
</pallas_src>

<mosaic_0001>
module attributes {stable_mosaic.version = 11 : i64} {
  func.func @_smoothing_ce_kernel(%arg0: i32, %arg1: memref<8x32xf32, #tpu.memory_space<vmem>>, %arg2: memref<8x1xi32, #tpu.memory_space<vmem>>, %arg3: memref<1x1x128xf32, #tpu.memory_space<vmem>>) attributes {dimension_semantics = [#tpu.dimension_semantics<parallel>], iteration_bounds = array<i64: 1>, scalar_prefetch = 0 : i64, scratch_operands = 0 : i64, tpu.core_type = #tpu.core_type<tc>, window_params = [{transform_indices = @transform_0, window_bounds = array<i64: 8, 32>}, {transform_indices = @transform_1, window_bounds = array<i64: 8, 1>}, {transform_indices = @transform_2, window_bounds = array<i64: 1, 1, 128>}]} {
    %c0 = arith.constant 0 : index
    %c0_0 = arith.constant 0 : index
    %0 = vector.load %arg1[%c0, %c0_0] : memref<8x32xf32, #tpu.memory_space<vmem>>, vector<8x32xf32>
    %c0_1 = arith.constant 0 : index
    %c0_2 = arith.constant 0 : index
    %1 = vector.load %arg2[%c0_1, %c0_2] : memref<8x1xi32, #tpu.memory_space<vmem>>, vector<8x1xi32>
    %c8_i32 = arith.constant 8 : i32
    %2 = arith.muli %arg0, %c8_i32 : i32
    %3 = tpu.iota {dimensions = array<i32: 0>} : vector<8x1xi32>
    %4 = vector.broadcast %2 : i32 to vector<8x1xi32>
    %5 = arith.addi %4, %3 : vector<8x1xi32>
    %c8_i32_3 = arith.constant 8 : i32
    %6 = vector.broadcast %c8_i32_3 : i32 to vector<8x1xi32>
    %7 = arith.cmpi slt, %5, %6 : vector<8x1xi32>
    %cst = arith.constant 0.000000e+00 : f32
    %8 = vector.shape_cast %7 : vector<8x1xi1> to vector<8x1xi1>
    %9 = vector.broadcast %8 : vector<8x1xi1> to vector<8x32xi1>
    %10 = vector.broadcast %cst : f32 to vector<8x32xf32>
    %11 = arith.select %9, %0, %10 : vector<8x32xi1>, vector<8x32xf32>
    %cst_4 = arith.constant dense<0xFF800000> : vector<8xf32>
    %12 = vector.multi_reduction <maximumf>, %11, %cst_4 [1] : vector<8x32xf32> to vector<8xf32>
    %13 = vector.shape_cast %12 : vector<8xf32> to vector<8x1xf32>
    %14 = vector.broadcast %13 : vector<8x1xf32> to vector<8x32xf32>
    %15 = arith.subf %11, %14 : vector<8x32xf32>
    %16 = math.exp %15 : vector<8x32xf32>
    %cst_5 = arith.constant dense<0.000000e+00> : vector<8xf32>
    %17 = vector.multi_reduction <add>, %16, %cst_5 [1] : vector<8x32xf32> to vector<8xf32>
    %18 = vector.shape_cast %17 : vector<8xf32> to vector<8x1xf32>
    %19 = tpu.iota {dimensions = array<i32: 1>} : vector<8x32xi32>
    %20 = vector.broadcast %1 : vector<8x1xi32> to vector<8x32xi32>
    %21 = arith.cmpi eq, %19, %20 : vector<8x32xi32>
    %cst_6 = arith.constant 0.899999976 : f32
    %cst_7 = arith.constant 0.0032258064 : f32
    %22 = vector.broadcast %cst_6 : f32 to vector<8x32xf32>
    %23 = vector.broadcast %cst_7 : f32 to vector<8x32xf32>
    %24 = arith.select %21, %22, %23 : vector<8x32xi1>, vector<8x32xf32>
    %25 = arith.mulf %24, %15 : vector<8x32xf32>
    %cst_8 = arith.constant dense<0.000000e+00> : vector<8xf32>
    %26 = vector.multi_reduction <add>, %25, %cst_8 [1] : vector<8x32xf32> to vector<8xf32>
    %27 = vector.shape_cast %26 : vector<8xf32> to vector<8x1xf32>
    %28 = math.log %18 : vector<8x1xf32>
    %29 = arith.subf %28, %27 : vector<8x1xf32>
    %cst_9 = arith.constant 0.000000e+00 : f32
    %30 = vector.broadcast %cst_9 : f32 to vector<8x1xf32>
    %31 = arith.select %7, %29, %30 : vector<8x1xi1>, vector<8x1xf32>
    %32 = vector.shape_cast %31 : vector<8x1xf32> to vector<1x8x1xf32>
    %cst_10 = arith.constant dense<0.000000e+00> : vector<1xf32>
    %33 = vector.multi_reduction <add>, %32, %cst_10 [1, 2] : vector<1x8x1xf32> to vector<1xf32>
    %34 = vector.shape_cast %33 : vector<1xf32> to vector<1x1x1xf32>
    %35 = vector.extract %34[0, 0, 0] : f32 from vector<1x1x1xf32>
    %36 = tpu.iota {dimensions = array<i32: 2>} : vector<1x1x128xi32>
    %c0_i32 = arith.constant 0 : i32
    %37 = vector.broadcast %c0_i32 : i32 to vector<1x1x128xi32>
    %38 = arith.cmpi eq, %36, %37 : vector<1x1x128xi32>
    %cst_11 = arith.constant 0.000000e+00 : f32
    %39 = vector.broadcast %35 : f32 to vector<1x1x128xf32>
    %40 = vector.broadcast %cst_11 : f32 to vector<1x1x128xf32>
    %41 = arith.select %38, %39, %40 : vector<1x1x128xi1>, vector<1x1x128xf32>
    %c0_12 = arith.constant 0 : index
    %c0_13 = arith.constant 0 : index
    %c0_14 = arith.constant 0 : index
    %42 = vector.load %arg3[%c0_12, %c0_13, %c0_14] : memref<1x1x128xf32, #tpu.memory_space<vmem>>, vector<1x1x128xf32>
    tpu.vector_store %arg3[%c0_12, %c0_13, %c0_14], %41 {strides = array<i32>} : memref<1x1x128xf32, #tpu.memory_space<vmem>>, vector<1x1x128xf32>,
    return
  }
  func.func @transform_0(%arg0: i32) -> (i32, i32) {
    %c0_i32 = arith.constant 0 : i32
    %c0_i32_0 = arith.constant 0 : i32
    return %arg0, %c0_i32 : i32, i32
  }
  func.func @transform_1(%arg0: i32) -> (i32, i32) {
    %c0_i32 = arith.constant 0 : i32
    %c0_i32_0 = arith.constant 0 : i32
    return %arg0, %c0_i32 : i32, i32
  }
  func.func @transform_2(%arg0: i32) -> (i32, i32, i32) {
    %c0_i32 = arith.constant 0 : i32
    %c0_i32_0 = arith.constant 0 : i32
    %c0_i32_1 = arith.constant 0 : i32
    return %arg0, %c0_i32, %c0_i32_0 : i32, i32, i32
  }
}

</mosaic_0001>

<llo_original>
// kernel: tpu_custom_call.1
$region0: #{tpu_custom_call.1}
  #allocation0 [shape = 'u32[]', space=smem, size = 0x4, offset = 0x4, fixed_abs, tag = 'smem constant byte address 0x4 - core index']
  #allocation1 [shape = 'u32[144,128]{1,0:T(1,128)}', space=vmem, size = 0x12000, scoped, tag = 'internal scratch']
  %s0 = inlined_call_operand.vmem [shape: f32[8,32], index: 0, kind: input, shape index: {}]
  %s1 = inlined_call_operand.vmem [shape: s32[8,1], index: 1, kind: input, shape index: {}]
  %s2 = inlined_call_operand.hbm [shape: f32[1,1,128], index: 2, kind: output, shape index: {}]
  %s3 = sld [smem:[#allocation0]]
  $region18: #{tpu_custom_call.1} parent=0
    _
  %s5 = ssub.s32 1, %s3
  %s6 = scalar_select 0, %s5, %s3
  $region1: #{tpu_custom_call.1} parent=0
    #allocation2 [shape = 'u8[512]{0}', space=vmem, size = 0x400, scoped, tag = 'output window, operand 0, single buffered']
    #allocation3 [shape = 's32[1]{0}', space=sflag, size = 0x4, scoped, tag = 'scoped memory for tpu_custom_call.1']
    %7 = vsyncpa [#allocation3], 0
    // Predicated region
    $region2: #{tpu_custom_call.1} parent=1 // pred_check
      _
    $region3: #{tpu_custom_call.1} parent=1 // pred_check_branch
      %9 = sbr.rel (0) target = $region5
    $region4: #{tpu_custom_call.1} parent=1 // pred_region
      _
    $region5: #{tpu_custom_call.1} parent=1 // pred_fallthru
      _
    // Predicated region
    $region6: #{tpu_custom_call.1} parent=1 // pred_check
      _
    $region7: #{tpu_custom_call.1} parent=1 // pred_check_branch
      %11 = sbr.rel (0) target = $region9
    $region8: #{tpu_custom_call.1} parent=1 // pred_region
      _
    $region9: #{tpu_custom_call.1} parent=1 // pred_fallthru
      _
    %v12 = vld [vmem:[%s0] sm:$0xff]
    %v13 = vld [vmem:[%s1] sm:$0xff]
    %s14 = smul.u32 0, 8
    %v15 = vlaneseq
    %v16 = vshrl.u32 %v15, 7
    %v17 = vstv %s14
    %v18 = vadd.s32 %v17, %v16
    %vm19 = vcmp.lt.s32.totalorder %v18, 8
    %v20 = vsel %vm19, 1, 0
    %vm21 = vcmp.eq.s32.totalorder %v20, 1
    %v22 = vsel %vm21, %v12, 0.0
    %vm23 = vcmask 261120
    %v24 = vsel %vm23, %v22, -inf
    %25 = vmax.xlane.f32.xlu0 %v24
    %v26 = vpop.xlane.xlu0 %25
    %v27 = vsub.f32 %v22, %v26
    %v28 = vmul.f32 %v27, 1.442695
    %v29 = vpow.pop %v28
    %v30 = vsel %vm23, %v29, 0.0
    %31 = vadd.xlane.f32.xlu0 %v30
    %v32 = vpop.xlane.xlu0 %31
    %v33 = vlaneseq
    %v34 = vand.u32 %v33, 127
    %35 = vset.pattern.permute.xlu0 0
    %36 = vperm.xlu0 %35, %v13
    %v37 = vpop.permute.xlu0 %36
    %vm38 = vcmp.eq.s32.totalorder %v34, %v37
    %v39 = vsel %vm38, 0.9, 0.0032258064
    %v40 = vmul.f32 %v39, %v27
    %v41 = vsel %vm23, %v40, 0.0
    %42 = vadd.xlane.f32.xlu0 %v41
    %v43 = vpop.xlane.xlu0 %42
    %v44 = vlog2.pop %v32
    %v45 = vmul.f32 %v44, 0.6931472
    %v46 = vsub.f32 %v45, %v43
    %v47 = vsel %vm19, %v46, 0.0
    %vm48 = vcmask 7168
    %v49 = vsel %vm48, %v47, 0.0
    %50 = vadd.xlane.f32.xlu0 %v49
    %v51 = vpop.xlane.xlu0 %50
    %v52 = vrot.slane %v51, 4
    %v53 = vadd.f32 %v51, %v52
    %v54 = vrot.slane %v53, 2
    %v55 = vadd.f32 %v53, %v54
    %v56 = vrot.slane %v55, 1
    %v57 = vadd.f32 %v55, %v56
    %s58 = vtos %v57
    %vm59 = vcmp.eq.s32.totalorder %v34, 0
    %v60 = vstv %s58
    %v61 = vsel %vm59, %v60, 0.0
    %62 = vst [vmem:[#allocation2] sm:$0x1] %v61
    // Predicated region
    $region10: #{tpu_custom_call.1} parent=1 // pred_check
      _
    $region11: #{tpu_custom_call.1} parent=1 // pred_check_branch
      %64 = sbr.rel (0) target = $region13
    $region12: #{tpu_custom_call.1} parent=1 // pred_region
      %s66 = ssub.s32 16, 16
      %67 = vsyncadd [#allocation3], %s66
      %s69 = sshll.u32 [#allocation2], 4
      %s70 = int_to_ptr.vmem [resolvable:$true] %s69
      %72 = dma.vmem_to_hbm [thread:$0]  %s70, 16, %s2, [#allocation3]
    $region13: #{tpu_custom_call.1} parent=1 // pred_fallthru
      _
    // Predicated region
    $region14: #{tpu_custom_call.1} parent=1 // pred_check
      _
    $region15: #{tpu_custom_call.1} parent=1 // pred_check_branch
      %74 = sbr.rel (0) target = $region17
    $region16: #{tpu_custom_call.1} parent=1 // pred_region
      %75 = dma.done [#allocation3], 16
    $region17: #{tpu_custom_call.1} parent=1 // pred_fallthru
      _
    %76 = vsyncpa [#allocation3], 1

</llo_original>
